<compile_context>
chip_gen: v7x
topology: tpu7x:2x2x1
jax: 0.10.0
libtpu: 0.0.40
codegen_flags: <defaults>
</compile_context>

<pallas_src>
import numpy as np
import jax
import jax.numpy as jnp
from jax.experimental import pallas as pl
from jax.experimental.pallas import tpu as pltpu


# ---------------------------------------------------------------- exponents

def _static_powers(powers):
    """Concrete exponent values if available at trace time, else None."""
    try:
        return [float(p) for p in np.asarray(powers, dtype=np.float32)]
    except Exception:  # traced (jit argument) -> generic SMEM-exponent kernel
        return None


def _int_pow(v, k):
    """v**k for Python int k >= 1 via exponentiation by squaring (VPU only)."""
    r, base = None, v
    while k > 0:
        if k & 1:
            r = base if r is None else r * base
        k >>= 1
        if k:
            base = base * base
    return r


def _pow_const(v, p):
    """v**p for an f32 array v and a Python-float exponent known at trace time."""
    p = float(p)
    if p == 0.0:
        return jnp.ones_like(v)
    if p == 1.0:
        return v
    ap = abs(p)
    r = None
    if ap.is_integer() and ap <= 64:
        r = _int_pow(v, int(ap))                      # sign-correct (matches torch)
    elif (2.0 * ap).is_integer() and ap <= 64.5:      # half-integer: k +/- 0.5
        k = int(ap - 0.5)
        s = jnp.sqrt(v)
        r = s if k == 0 else _int_pow(v, k) * s
    if r is not None:
        return (1.0 / r) if p < 0.0 else r
    # General fractional exponent: EUP exp/log path (NaN for v < 0, matching
    # torch.pow's real-domain behaviour for non-integral float exponents).
    return jnp.exp(jnp.float32(p) * jnp.log(v))


# ------------------------------------------------------------------ kernels

def _make_specialized_kernel(p_list, channel_axis, n_prefetch=0):
    """Kernel with per-(work-)channel exponents baked in at trace time."""
    by_exp = {}
    for i, p in enumerate(p_list):
        by_exp.setdefault(float(p), []).append(i)

    def _apply(xb, p, o_ref):
        if float(p) == 1.0:
            o_ref[...] = xb                                    # pure copy
        else:
            o_ref[...] = _pow_const(xb.astype(jnp.float32), p).astype(o_ref.dtype)

    def kernel(*refs):
        x_ref, o_ref = refs[n_prefetch], refs[n_prefetch + 1]
        xb = x_ref[...]
        if len(by_exp) == 1:              # all (work-)channels share one exponent
            _apply(xb, next(iter(by_exp)), o_ref)
            return
        c = pl.program_id(channel_axis)
        for p, idxs in by_exp.items():
            pred = c == idxs[0]
            for j in idxs[1:]:
                pred = pred | (c == j)

            @pl.when(pred)
            def _(p=p):
                _apply(xb, p, o_ref)

    return kernel


def _make_generic_kernel(n_powered, channel_axis):
    """Fallback for traced exponents: f32 scalars read from SMEM."""
    def kernel(p_ref, x_ref, o_ref):
        c = pl.program_id(channel_axis)

        @pl.when(c < n_powered)
        def _():
            p = p_ref[c]                                       # f32 scalar
            # TODO(synk): jnp.power with a *traced* float exponent is NaN for
            # negative bases even when the exponent is integral; torch.pow is not.
            o_ref[...] = jnp.power(x_ref[...].astype(jnp.float32), p).astype(o_ref.dtype)

        @pl.when(c >= n_powered)
        def _():
            o_ref[...] = x_ref[...]                            # pass-through

    return kernel


# ------------------------------------------------------------------- tiling

def _factor_spatial(hw, max_lanes=2048):
    """View H*W as (R, L): prefer a lane dim L multiple of 128 AND a sublane dim
    R = hw // L >= 8, so VMEM tiles are dense in both minor dims."""
    cands = [L for L in range(128, min(hw, max_lanes) + 1, 128) if hw % L == 0]
    dense = [L for L in cands if hw // L >= 8]
    if dense:
        return hw // max(dense), max(dense)   # widest L that keeps >= 8 sublanes
    if cands:
        L = min(cands)                        # full 128-lane groups; maximize R
        return hw // L, L
    # No 128-multiple divisor: keep sublanes dense (R multiple of 8), accept a
    # lane dim that is not a multiple of 128 (masked tail lanes).
    for R in range(8, hw + 1, 8):
        if hw % R == 0 and hw // R <= max_lanes:
            return R, hw // R
    return 1, hw                              # tiny / prime spatial extent


def _pick_block(n, r, lanes, itemsize, target_bytes):
    """Choose (bN, bR) so bN*bR*L*itemsize ~= target_bytes.  bR steps in dtype-aware
    sublane multiples (8 f32 / 16 bf16 / 32 int8) so packed sublanes stay whole; if
    r has no suitable divisor, cap bR at the budget and use a ragged cdiv grid."""
    step = 8 * max(1, 4 // max(1, itemsize))
    row_bytes = max(1, lanes * itemsize)
    max_rows = max(step, target_bytes // row_bytes)
    if r <= max_rows:
        br = r                                   # full extent: always layout-legal
    else:
        cands = [d for d in range(step, max_rows + 1, step) if r % d == 0]
        br = max(cands) if cands else (max_rows // step) * step  # ragged last tile
    bn = max(1, min(n, max_rows // max(br, 1)))
    while n % bn:
        bn -= 1
    return bn, br


def _default_block_bytes():
    """~4 MiB tiles; footprint is ~4x (double-buffered in + out), kept well under
    per-core VMEM (64 MiB physical on v7x, 128 MiB on v5e/v6e)."""
    try:
        vmem = int(getattr(pltpu.get_tpu_info(), "vmem_capacity_bytes", 64 << 20))
    except Exception:
        vmem = 64 << 20
    return int(max(1 << 20, min(4 << 20, vmem // 16)))


# ------------------------------------------------------------------ wrapper

def power_layer(x, powers, *, donate_x=False, target_block_bytes=None):
    """Functional equivalent of PowerLayer.forward.

    donate_x=True aliases the input buffer with the output (true in-place if the
    caller donates x); identity (p == 1) and trailing channels are then never read
    or written.
    """
    N, C, H, W = x.shape
    if x.size == 0:
        return x
    hw = H * W

    static_p = _static_powers(powers)
    n_p = len(static_p) if static_p is not None else int(powers.shape[0])
    n_p = min(n_p, C)
    if n_p == 0:
        return x
    if static_p is not None and not donate_x and all(p == 1.0 for p in static_p[:n_p]):
        return x                                   # pure identity, no kernel needed

    if target_block_bytes is None:
        target_block_bytes = _default_block_bytes()

    # Lane/sublane-dense view of the per-channel spatial extent (free reshape).
    R, L = _factor_spatial(hw)
    bN, bR = _pick_block(N, R, L, x.dtype.itemsize, target_block_bytes)
    x4 = x.reshape(N, C, R, L)
    block = (bN, 1, bR, L)
    grid_nr = (N // bN, pl.cdiv(R, bR))
    out_shape = jax.ShapeDtypeStruct((N, C, R, L), x.dtype)

    # VMEM footprint ~= 2 in + 2 out buffers; raise the scoped-VMEM limit
    # explicitly once that approaches v5e's 16 MiB default.
    tile_bytes = bN * bR * L * x.dtype.itemsize
    cp_kwargs = {}
    if 4 * tile_bytes > 12 * 1024 * 1024:
        cp_kwargs["vmem_limit_bytes"] = int(4 * tile_bytes + (2 << 20))
    cparams = pltpu.CompilerParams(
        dimension_semantics=("parallel", "parallel", "parallel"), **cp_kwargs)

    elems_per_chan = N * R * L
    itemsize = x.dtype.itemsize

    def _cost(c_work, n_transc_chan):
        return pl.CostEstimate(
            flops=int(4 * c_work * elems_per_chan),
            transcendentals=int(n_transc_chan * elems_per_chan),
            bytes_accessed=int(2 * c_work * elems_per_chan * itemsize))

    if static_p is not None:
        if donate_x:
            work = [c for c in range(n_p) if static_p[c] != 1.0]
            if not work:
                return x
        else:
            work = list(range(C))
        p_work = [(static_p[c] if c < n_p else 1.0) for c in work]
        n_transc = sum(1 for p in p_work if not float(p).is_integer())
        cost = _cost(len(work), n_transc)
        grid = grid_nr + (len(work),)

        if work == list(range(len(work))):
            # Work channels are a contiguous prefix: plain blocked grid.
            idx = lambda nb, rb, c: (nb, c, rb, 0)
            y4 = pl.pallas_call(
                _make_specialized_kernel(p_work, channel_axis=2),
                out_shape=out_shape,
                grid=grid,
                in_specs=[pl.BlockSpec(block, idx)],
                out_specs=pl.BlockSpec(block, idx),
                input_output_aliases={0: 0} if donate_x else {},
                compiler_params=cparams,
                cost_estimate=cost,
            )(x4)
        else:
            # Skip identity channels: a scalar-prefetched channel-id table drives
            # the index_map, so skipped channels are never read or written.
            ch_ids = jnp.asarray(work, dtype=jnp.int32)
            idx = lambda nb, rb, i, ch: (nb, ch[i], rb, 0)
            y4 = pl.pallas_call(
                _make_specialized_kernel(p_work, channel_axis=2, n_prefetch=1),
                out_shape=out_shape,
                grid_spec=pltpu.PrefetchScalarGridSpec(
                    num_scalar_prefetch=1,
                    grid=grid,
                    in_specs=[pl.BlockSpec(block, idx)],
                    out_specs=pl.BlockSpec(block, idx)),
                input_output_aliases={1: 0},          # x4 (scalar arg is input 0)
                compiler_params=cparams,
                cost_estimate=cost,
            )(ch_ids, x4)
    else:
        # Traced exponents: read f32 scalars from SMEM inside the kernel.
        p_arr = jnp.asarray(powers, jnp.float32)[:n_p]
        idx = lambda nb, rb, c: (nb, c, rb, 0)
        y4 = pl.pallas_call(
            _make_generic_kernel(n_p, channel_axis=2),
            out_shape=out_shape,
            grid=grid_nr + (C,),
            in_specs=[pl.BlockSpec(memory_space=pltpu.MemorySpace.SMEM),
                      pl.BlockSpec(block, idx)],
            out_specs=pl.BlockSpec(block, idx),
            input_output_aliases={1: 0} if donate_x else {},
            compiler_params=cparams,
            cost_estimate=_cost(C, C),
        )(p_arr, x4)

    return y4.reshape(N, C, H, W)


if __name__ == "__main__":
    key = jax.random.PRNGKey(0)
    N, C, H, W = 2, 4, 16, 16

    # PowerLayer stores one exponent per leading channel, fixed at init.
    powers = jnp.array([1.0, 2.0, 0.5, 3.0], dtype=jnp.float32)

    # Positive inputs so fractional exponents are well defined (same real-domain
    # behaviour as torch.pow).
    x = jax.random.uniform(key, (N, C, H, W), jnp.float32, minval=0.5, maxval=1.5)

    # Plain-JAX reference of the PyTorch forward semantics.
    ref = x
    for c_i in range(powers.shape[0]):
        ref = ref.at[:, c_i, :, :].set(jnp.power(x[:, c_i, :, :], powers[c_i]))

    # 1) Specialized path (concrete exponents -> copy / VPU multiplies / sqrt).
    y = jax.block_until_ready(power_layer(x, powers))
    assert y.shape == x.shape and y.dtype == x.dtype
    assert jnp.allclose(y, ref, rtol=1e-4, atol=1e-6)

    # 2) Aliased / channel-skipping path (identity channel 0 never read/written).
    y_d = jax.block_until_ready(
        jax.jit(lambda a: power_layer(a, powers, donate_x=True))(x))
    assert jnp.allclose(y_d, ref, rtol=1e-4, atol=1e-6)

    # 3) Generic SMEM-exponent path (powers traced under jit).
    y_jit = jax.block_until_ready(jax.jit(power_layer)(x, powers))
    assert jnp.allclose(y_jit, ref, rtol=1e-4, atol=1e-5)

    print("KERNEL_OK")
</pallas_src>

<mosaic_0001>
module attributes {stable_mosaic.version = 11 : i64} {
  func.func @kernel(%arg0: i32, %arg1: i32, %arg2: i32, %arg3: memref<2x1x2x128xf32, #tpu.memory_space<vmem>>, %arg4: memref<2x1x2x128xf32, #tpu.memory_space<vmem>>) attributes {dimension_semantics = [#tpu.dimension_semantics<parallel>, #tpu.dimension_semantics<parallel>, #tpu.dimension_semantics<parallel>], iteration_bounds = array<i64: 1, 1, 4>, scalar_prefetch = 0 : i64, scratch_operands = 0 : i64, tpu.core_type = #tpu.core_type<tc>, window_params = [{transform_indices = @transform_0, window_bounds = array<i64: 2, 1, 2, 128>}, {transform_indices = @transform_1, window_bounds = array<i64: 2, 1, 2, 128>}]} {
    %c0 = arith.constant 0 : index
    %c0_0 = arith.constant 0 : index
    %c0_1 = arith.constant 0 : index
    %c0_2 = arith.constant 0 : index
    %0 = vector.load %arg3[%c0, %c0_0, %c0_1, %c0_2] : memref<2x1x2x128xf32, #tpu.memory_space<vmem>>, vector<2x1x2x128xf32>
    %c0_i32 = arith.constant 0 : i32
    %1 = arith.cmpi eq, %arg2, %c0_i32 : i32
    %2 = arith.extui %1 : i1 to i32
    %c0_i32_3 = arith.constant 0 : i32
    %3 = arith.cmpi ne, %2, %c0_i32_3 : i32
    scf.if %3 {
      %c0_7 = arith.constant 0 : index
      %c0_8 = arith.constant 0 : index
      %c0_9 = arith.constant 0 : index
      %c0_10 = arith.constant 0 : index
      %13 = vector.load %arg4[%c0_7, %c0_8, %c0_9, %c0_10] : memref<2x1x2x128xf32, #tpu.memory_space<vmem>>, vector<2x1x2x128xf32>
      tpu.vector_store %arg4[%c0_7, %c0_8, %c0_9, %c0_10], %0 {strides = array<i32>} : memref<2x1x2x128xf32, #tpu.memory_space<vmem>>, vector<2x1x2x128xf32>,
    } else {
    }
    %c1_i32 = arith.constant 1 : i32
    %4 = arith.cmpi eq, %arg2, %c1_i32 : i32
    %5 = arith.extui %4 : i1 to i32
    %c0_i32_4 = arith.constant 0 : i32
    %6 = arith.cmpi ne, %5, %c0_i32_4 : i32
    scf.if %6 {
      %13 = arith.mulf %0, %0 : vector<2x1x2x128xf32>
      %c0_7 = arith.constant 0 : index
      %c0_8 = arith.constant 0 : index
      %c0_9 = arith.constant 0 : index
      %c0_10 = arith.constant 0 : index
      %14 = vector.load %arg4[%c0_7, %c0_8, %c0_9, %c0_10] : memref<2x1x2x128xf32, #tpu.memory_space<vmem>>, vector<2x1x2x128xf32>
      tpu.vector_store %arg4[%c0_7, %c0_8, %c0_9, %c0_10], %13 {strides = array<i32>} : memref<2x1x2x128xf32, #tpu.memory_space<vmem>>, vector<2x1x2x128xf32>,
    } else {
    }
    %c2_i32 = arith.constant 2 : i32
    %7 = arith.cmpi eq, %arg2, %c2_i32 : i32
    %8 = arith.extui %7 : i1 to i32
    %c0_i32_5 = arith.constant 0 : i32
    %9 = arith.cmpi ne, %8, %c0_i32_5 : i32
    scf.if %9 {
      %13 = math.sqrt %0 : vector<2x1x2x128xf32>
      %c0_7 = arith.constant 0 : index
      %c0_8 = arith.constant 0 : index
      %c0_9 = arith.constant 0 : index
      %c0_10 = arith.constant 0 : index
      %14 = vector.load %arg4[%c0_7, %c0_8, %c0_9, %c0_10] : memref<2x1x2x128xf32, #tpu.memory_space<vmem>>, vector<2x1x2x128xf32>
      tpu.vector_store %arg4[%c0_7, %c0_8, %c0_9, %c0_10], %13 {strides = array<i32>} : memref<2x1x2x128xf32, #tpu.memory_space<vmem>>, vector<2x1x2x128xf32>,
    } else {
    }
    %c3_i32 = arith.constant 3 : i32
    %10 = arith.cmpi eq, %arg2, %c3_i32 : i32
    %11 = arith.extui %10 : i1 to i32
    %c0_i32_6 = arith.constant 0 : i32
    %12 = arith.cmpi ne, %11, %c0_i32_6 : i32
    scf.if %12 {
      %13 = arith.mulf %0, %0 : vector<2x1x2x128xf32>
      %14 = arith.mulf %0, %13 : vector<2x1x2x128xf32>
      %c0_7 = arith.constant 0 : index
      %c0_8 = arith.constant 0 : index
      %c0_9 = arith.constant 0 : index
      %c0_10 = arith.constant 0 : index
      %15 = vector.load %arg4[%c0_7, %c0_8, %c0_9, %c0_10] : memref<2x1x2x128xf32, #tpu.memory_space<vmem>>, vector<2x1x2x128xf32>
      tpu.vector_store %arg4[%c0_7, %c0_8, %c0_9, %c0_10], %14 {strides = array<i32>} : memref<2x1x2x128xf32, #tpu.memory_space<vmem>>, vector<2x1x2x128xf32>,
    } else {
    }
    return
  }
  func.func @transform_0(%arg0: i32, %arg1: i32, %arg2: i32) -> (i32, i32, i32, i32) {
    %c0_i32 = arith.constant 0 : i32
    %c0_i32_0 = arith.constant 0 : i32
    return %arg0, %arg2, %arg1, %c0_i32 : i32, i32, i32, i32
  }
  func.func @transform_1(%arg0: i32, %arg1: i32, %arg2: i32) -> (i32, i32, i32, i32) {
    %c0_i32 = arith.constant 0 : i32
    %c0_i32_0 = arith.constant 0 : i32
    return %arg0, %arg2, %arg1, %c0_i32 : i32, i32, i32, i32
  }
}

</mosaic_0001>

<llo_original>
// kernel: tpu_custom_call.1
$region0: #{tpu_custom_call.1}
  #allocation0 [shape = 'u32[]', space=smem, size = 0x4, offset = 0x4, fixed_abs, tag = 'smem constant byte address 0x4 - core index']
  #allocation1 [shape = 'u32[144,128]{1,0:T(1,128)}', space=vmem, size = 0x12000, scoped, tag = 'internal scratch']
  %s0 = inlined_call_operand.hbm [shape: f32[2,4,2,128], index: 0, kind: input, shape index: {}]
  %s1 = inlined_call_operand.hbm [shape: f32[2,4,2,128], index: 1, kind: output, shape index: {}]
  %s2 = sld [smem:[#allocation0]]
  $region57: #{tpu_custom_call.1} parent=0
    _
  %s4 = ssub.s32 1, %s2
  %s5 = scalar_select 0, %s4, %s2
  $region1: #{tpu_custom_call.1} parent=0
    #allocation2 [shape = 'u8[4096]{0}', space=vmem, size = 0x1000, scoped, tag = 'input window, operand 0']
    #allocation3 [shape = 's32[2]{0}', space=sflag, size = 0x8, scoped, tag = 'scoped memory for tpu_custom_call.1']
    #allocation4 [shape = 's32[2]{0}', space=sflag, size = 0x8, scoped, tag = 'scoped memory for tpu_custom_call.1']
    #allocation5 [shape = 'u8[4096]{0}', space=vmem, size = 0x1000, scoped, tag = 'output window, operand 0']
    %6 = vsyncpa [#allocation3], 0
    %s7 = scalar_lea.sflag [#allocation3], 1
    %8 = vsyncpa %s7, 0
    %9 = vsyncpa [#allocation4], 0
    %s10 = scalar_lea.sflag [#allocation4], 1
    %11 = vsyncpa %s10, 0
    loop: start=0, step=1, limit=6
    $region2: #{tpu_custom_call.1} parent=1 // loop_pre_header
      _
    $region3: #{tpu_custom_call.1} parent=1 // loop_header
      %s13 = sphi 0, %s17
      %p14 = scmp.ge.s32.totalorder %s13, 6
      %s20 = sphi 0, %s39
      %s21 = sphi 0, %s35
      %s22 = sphi 0, %s31
      %s23 = sphi 0, %s20
      %s24 = sphi 0, %s21
      %s25 = sphi 0, %s22
      %s26 = sphi 0, %s23
      %s27 = sphi 0, %s24
      %s28 = sphi 0, %s25
      %s46 = sphi 0, %s48
      %s49 = sphi 0, %s46
      %s50 = sphi 0, %s49
      %s66 = sphi 0, %s50
      %s76 = sphi 0, %s78
      %s79 = sphi 0, %s76
      %s80 = sphi 0, %s79
      %s96 = sphi 0, %s80
    $region4: #{tpu_custom_call.1} parent=1 // loop_header_branch
      %16 = sbr.rel (%p14) target = $region8
    $region5: #{tpu_custom_call.1} parent=1 // loop_body
      %s18 = ssub.s32 %s13, 1
      %s19 = ssub.s32 %s13, 2
      %s29 = sadd.s32 1, %s22
      %p30 = scmp.ge.s32.totalorder %s29, 4
      %s31 = scalar_select %p30, 0, %s29
      %s32 = sadd.s32 1, %s21
      %s33 = scalar_select %p30, %s32, %s21
      %p34 = scmp.ge.s32.totalorder %s33, 1
      %s35 = scalar_select %p34, 0, %s33
      %s36 = sadd.s32 1, %s20
      %s37 = scalar_select %p34, %s36, %s20
      %p38 = scmp.ge.s32.totalorder %s37, 1
      %s39 = scalar_select %p38, 0, %s37
      %s40 = ssub.s32 %s20, %s39
      %s41 = ssub.s32 %s22, %s31
      %s42 = sor.u32 %s40, %s41
      %s43 = ssub.s32 %s21, %s35
      %s44 = sor.u32 %s42, %s43
      %p45 = scmp.eq.s32.totalorder %s44, 0
      %s47 = sadd.s32 %s46, 1
      %s48 = scalar_select %p45, %s46, %s47
      %p51 = pneg %p45
      %p52 = scmp.eq.s32.totalorder %s13, 3
      %p53 = por %p51, %p52
      %p54 = scmp.ne.s32.totalorder %s46, %s49
      %p55 = scmp.eq.s32.totalorder %s13, 0
      %p56 = por %p54, %p55
      %p57 = scmp.ne.s32.totalorder %s46, %s49
      %p58 = scmp.eq.s32.totalorder %s18, 3
      %p59 = por %p57, %p58
      %p60 = scmp.ne.s32.totalorder %s49, %s50
      %p61 = scmp.eq.s32.totalorder %s18, 0
      %p62 = por %p60, %p61
      %p63 = scmp.ne.s32.totalorder %s49, %s50
      %p64 = scmp.eq.s32.totalorder %s19, 3
      %p65 = por %p63, %p64
      %p67 = scmp.ne.s32.totalorder %s50, %s66
      %p68 = scmp.eq.s32.totalorder %s19, 0
      %p69 = por %p67, %p68
      %s70 = ssub.s32 %s20, %s39
      %s71 = ssub.s32 %s22, %s31
      %s72 = sor.u32 %s70, %s71
      %s73 = ssub.s32 %s21, %s35
      %s74 = sor.u32 %s72, %s73
      %p75 = scmp.eq.s32.totalorder %s74, 0
      %s77 = sadd.s32 %s76, 1
      %s78 = scalar_select %p75, %s76, %s77
      %p81 = pneg %p75
      %p82 = scmp.eq.s32.totalorder %s13, 3
      %p83 = por %p81, %p82
      %p84 = scmp.ne.s32.totalorder %s76, %s79
      %p85 = scmp.eq.s32.totalorder %s13, 0
      %p86 = por %p84, %p85
      %p87 = scmp.ne.s32.totalorder %s76, %s79
      %p88 = scmp.eq.s32.totalorder %s18, 3
      %p89 = por %p87, %p88
      %p90 = scmp.ne.s32.totalorder %s79, %s80
      %p91 = scmp.eq.s32.totalorder %s18, 0
      %p92 = por %p90, %p91
      %p93 = scmp.ne.s32.totalorder %s79, %s80
      %p94 = scmp.eq.s32.totalorder %s19, 3
      %p95 = por %p93, %p94
      %p97 = scmp.ne.s32.totalorder %s80, %s96
      %p98 = scmp.eq.s32.totalorder %s19, 0
      %p99 = por %p97, %p98
      %p100 = scmp.le.s32.totalorder 1, %s13
      %p101 = scmp.lt.s32.totalorder %s13, 5
      %p102 = pnand %p100, %p101
      %p103 = pneg %p102
      // Predicated region
      $region9: #{tpu_custom_call.1} parent=5 // pred_check
        _
      $region10: #{tpu_custom_call.1} parent=5 // pred_check_branch
        %105 = sbr.rel (%p102) target = $region12
      $region11: #{tpu_custom_call.1} parent=5 // pred_region
        %s106 = ssub.s32 %s13, 1
      $region12: #{tpu_custom_call.1} parent=5 // pred_fallthru
        _
      %p107 = scmp.lt.s32.totalorder %s13, 4
      // Predicated region
      $region13: #{tpu_custom_call.1} parent=5 // pred_check
        %p108 = pneg %p107
      $region14: #{tpu_custom_call.1} parent=5 // pred_check_branch
        %110 = sbr.rel (%p108) target = $region16
      $region15: #{tpu_custom_call.1} parent=5 // pred_region
        // Predicated region
        $region17: #{tpu_custom_call.1} parent=15 // pred_check
          %p111 = pneg %p56
        $region18: #{tpu_custom_call.1} parent=15 // pred_check_branch
          %113 = sbr.rel (%p111) target = $region20
        $region19: #{tpu_custom_call.1} parent=15 // pred_region
          %s114 = sand.u32 %s46, 1
          %s115 = scalar_lea.sflag [#allocation3], %s114
          %s116 = sand.u32 %s46, 1
          %s117 = smul.addr %s116, 4
          %s118 = scalar_lea.vmem [#allocation2], %s117
          %s119 = smul.u32 2, %s20
          %s121 = ssub.s32 64, 64
          %122 = vsyncadd %s115, %s121
          %s123 = sadd.s32 %s21, %s22
          %s124 = smul.addr %s119, 4
          %s125 = sadd.s32 %s123, %s124
          %s126 = smul.addr %s125, 32
          %s127 = scalar_lea.hbm %s0, %s126
          %s128 = sshll.u32 %s118, 4
          %s129 = int_to_ptr.vmem [resolvable:$true] %s128
          %134 = dma.hbm_to_vmem [thread:$0]  %s127, 64, %s129, %s115, 128, 32, 2
        $region20: #{tpu_custom_call.1} parent=15 // pred_fallthru
          _
      $region16: #{tpu_custom_call.1} parent=5 // pred_fallthru
        _
      %p135 = scmp.le.s32.totalorder 1, %s13
      %p136 = scmp.lt.s32.totalorder %s13, 5
      %p137 = pnand %p135, %p136
      %p138 = pneg %p137
      // Predicated region
      $region21: #{tpu_custom_call.1} parent=5 // pred_check
        _
      $region22: #{tpu_custom_call.1} parent=5 // pred_check_branch
        %140 = sbr.rel (%p137) target = $region24
      $region23: #{tpu_custom_call.1} parent=5 // pred_region
        %s141 = ssub.s32 %s13, 1
        %s142 = sand.u32 %s49, 1
        %s143 = scalar_lea.sflag [#allocation3], %s142
        %s144 = sand.u32 %s49, 1
        %s145 = smul.addr %s144, 4
        %s146 = scalar_lea.vmem [#allocation2], %s145
        // Predicated region
        $region25: #{tpu_custom_call.1} parent=23 // pred_check
          %p147 = pneg %p62
        $region26: #{tpu_custom_call.1} parent=23 // pred_check_branch
          %149 = sbr.rel (%p147) target = $region28
        $region27: #{tpu_custom_call.1} parent=23 // pred_region
          %150 = dma.done %s143, 64
        $region28: #{tpu_custom_call.1} parent=23 // pred_fallthru
          _
        %s151 = sand.u32 %s49, 1
        %s152 = scalar_lea.sflag [#allocation3], %s151
        %s153 = sand.u32 %s49, 1
        %s154 = smul.addr %s153, 4
        %s155 = scalar_lea.vmem [#allocation2], %s154
        %p156 = pneg %p62
        %p157 = pneg %p59
        %p158 = pneg %p92
        %p159 = pneg %p89
        %s160 = sand.u32 %s79, 1
        %s161 = scalar_lea.sflag [#allocation4], %s160
        %s162 = sand.u32 %s79, 1
        %s163 = smul.addr %s162, 4
        %s164 = scalar_lea.vmem [#allocation5], %s163
        %s165 = smul.u32 2, %s23
        %s166 = smul.u32 2, %s23
        %v167 = vld [vmem:[%s146] sm:$0x3]
        %v168 = vld [vmem:[%s146 + $0x2] sm:$0x3]
        %p169 = scmp.eq.s32.totalorder %s25, 0
        // Predicated region
        $region29: #{tpu_custom_call.1} parent=23 // pred_check
          %p170 = pneg %p169
        $region30: #{tpu_custom_call.1} parent=23 // pred_check_branch
          %172 = sbr.rel (%p170) target = $region32
        $region31: #{tpu_custom_call.1} parent=23 // pred_region
          %173 = vst [vmem:[%s164] sm:$0x3] %v167
          %174 = vst [vmem:[%s164 + $0x2] sm:$0x3] %v168
        $region32: #{tpu_custom_call.1} parent=23 // pred_fallthru
          _
        %p175 = scmp.eq.s32.totalorder %s25, 1
        // Predicated region
        $region33: #{tpu_custom_call.1} parent=23 // pred_check
          %p176 = pneg %p175
        $region34: #{tpu_custom_call.1} parent=23 // pred_check_branch
          %178 = sbr.rel (%p176) target = $region36
        $region35: #{tpu_custom_call.1} parent=23 // pred_region
          %v179 = vmul.f32 %v167, %v167
          %v180 = vmul.f32 %v168, %v168
          %181 = vst [vmem:[%s164] sm:$0x3] %v179
          %182 = vst [vmem:[%s164 + $0x2] sm:$0x3] %v180
        $region36: #{tpu_custom_call.1} parent=23 // pred_fallthru
          _
        %p183 = scmp.eq.s32.totalorder %s25, 2
        // Predicated region
        $region37: #{tpu_custom_call.1} parent=23 // pred_check
          %p184 = pneg %p183
        $region38: #{tpu_custom_call.1} parent=23 // pred_check_branch
          %186 = sbr.rel (%p184) target = $region40
        $region39: #{tpu_custom_call.1} parent=23 // pred_region
          %v187 = vrsqrt.pop %v167
          %v188 = vmul.f32 %v167, %v187
          %vm189 = vcmp.eq.f32.partialorder %v167, inf
          %v190 = vsel %vm189, %v167, %v188
          %vm191 = vcmp.eq.f32.partialorder %v167, 0.0
          %v192 = vand.u32 %v167, 2147483648
          %v193 = vsel %vm191, %v192, %v190
          %v194 = vrsqrt.pop %v168
          %v195 = vmul.f32 %v168, %v194
          %vm196 = vcmp.eq.f32.partialorder %v168, inf
          %v197 = vsel %vm196, %v168, %v195
          %vm198 = vcmp.eq.f32.partialorder %v168, 0.0
          %v199 = vand.u32 %v168, 2147483648
          %v200 = vsel %vm198, %v199, %v197
          %201 = vst [vmem:[%s164] sm:$0x3] %v193
          %202 = vst [vmem:[%s164 + $0x2] sm:$0x3] %v200
        $region40: #{tpu_custom_call.1} parent=23 // pred_fallthru
          _
        %p203 = scmp.eq.s32.totalorder %s25, 3
        // Predicated region
        $region41: #{tpu_custom_call.1} parent=23 // pred_check
          %p204 = pneg %p203
        $region42: #{tpu_custom_call.1} parent=23 // pred_check_branch
          %206 = sbr.rel (%p204) target = $region44
        $region43: #{tpu_custom_call.1} parent=23 // pred_region
          %v207 = vmul.f32 %v167, %v167
          %v208 = vmul.f32 %v168, %v168
          %v209 = vmul.f32 %v167, %v207
          %v210 = vmul.f32 %v168, %v208
          %211 = vst [vmem:[%s164] sm:$0x3] %v209
          %212 = vst [vmem:[%s164 + $0x2] sm:$0x3] %v210
        $region44: #{tpu_custom_call.1} parent=23 // pred_fallthru
          _
        %s213 = sand.u32 %s79, 1
        %s214 = scalar_lea.sflag [#allocation4], %s213
        %s215 = sand.u32 %s79, 1
        %s216 = smul.addr %s215, 4
        %s217 = scalar_lea.vmem [#allocation5], %s216
        // Predicated region
        $region45: #{tpu_custom_call.1} parent=23 // pred_check
          %p218 = pneg %p89
        $region46: #{tpu_custom_call.1} parent=23 // pred_check_branch
          %220 = sbr.rel (%p218) target = $region48
        $region47: #{tpu_custom_call.1} parent=23 // pred_region
          %s221 = smul.u32 2, %s23
          %s223 = ssub.s32 64, 64
          %224 = vsyncadd %s214, %s223
          %s225 = sadd.s32 %s24, %s25
          %s226 = smul.addr %s221, 4
          %s227 = sadd.s32 %s225, %s226
          %s228 = smul.addr %s227, 32
          %s229 = scalar_lea.hbm %s1, %s228
          %s230 = sshll.u32 %s217, 4
          %s231 = int_to_ptr.vmem [resolvable:$true] %s230
          %236 = dma.vmem_to_hbm [thread:$0]  %s231, 64, %s229, %s214, 32, 128, 2
        $region48: #{tpu_custom_call.1} parent=23 // pred_fallthru
          _
      $region24: #{tpu_custom_call.1} parent=5 // pred_fallthru
        _
      %p237 = scmp.le.s32.totalorder 2, %s13
      // Predicated region
      $region49: #{tpu_custom_call.1} parent=5 // pred_check
        %p238 = pneg %p237
      $region50: #{tpu_custom_call.1} parent=5 // pred_check_branch
        %240 = sbr.rel (%p238) target = $region52
      $region51: #{tpu_custom_call.1} parent=5 // pred_region
        %s241 = ssub.s32 %s13, 2
        // Predicated region
        $region53: #{tpu_custom_call.1} parent=51 // pred_check
          %p242 = pneg %p95
        $region54: #{tpu_custom_call.1} parent=51 // pred_check_branch
          %244 = sbr.rel (%p242) target = $region56
        $region55: #{tpu_custom_call.1} parent=51 // pred_region
          %s245 = sand.u32 %s80, 1
          %s246 = scalar_lea.sflag [#allocation4], %s245
          %s247 = sand.u32 %s80, 1
          %s248 = smul.addr %s247, 4
          %s249 = scalar_lea.vmem [#allocation5], %s248
          %250 = dma.done %s246, 64
        $region56: #{tpu_custom_call.1} parent=51 // pred_fallthru
          _
      $region52: #{tpu_custom_call.1} parent=5 // pred_fallthru
        _
    $region6: #{tpu_custom_call.1} parent=1 // loop_footer
      %s17 = sadd.s32 1, %s13
    $region7: #{tpu_custom_call.1} parent=1 // loop_footer_branch
      %12 = sbr.rel target = $region3
    $region8: #{tpu_custom_call.1} parent=1 // loop_exit
      _
    %251 = vsyncpa [#allocation3], 1
    %s252 = scalar_lea.sflag [#allocation3], 1
    %253 = vsyncpa %s252, 1
    %254 = vsyncpa [#allocation4], 1
    %s255 = scalar_lea.sflag [#allocation4], 1
    %256 = vsyncpa %s255, 1

</llo_original>
